<compile_context>
chip_gen: v5e
topology: v5e:2x2
jax: 0.10.0
libtpu: 0.0.40
codegen_flags: <defaults>
</compile_context>

<pallas_src>
import jax
import jax.numpy as jnp
from jax import lax
from jax.experimental import pallas as pl
from jax.experimental.pallas import tpu as pltpu

# Problem sizes (small, consistent with the module's forward semantics)
N = 8           # no. of candidate entities
Q_DIM = 32      # question_emb_dim
E_DIM = 16      # entity_emb_dim
N_OV = 5        # overlap features
N_INT = 7       # interaction scores
N_FEAT = N_OV + N_INT   # 12
HIDDEN = 16     # num_hidden = [HIDDEN] (single hidden layer)

LANES = 128                         # lane width for the packed arrays
ONES_LANE = Q_DIM + 3 * E_DIM       # 80: constant-1 lane in the packed q/prev row
BIAS_LANE = N_OV + N_INT * E_DIM    # 117: constant-1 lane in the packed feature row


def model_mult_kernel(qprev_ref,   # (1, 128)   [q | pf | ps | pa | 1 | 0...]
                      feat_ref,    # (N, 128)   [overlap | p | lit | cat | ent | s | s | s | 1 | 0...]
                      wproj_ref,   # (128, 128) block-structured projection weight
                      w1_ref,      # (128, H)   expanded masked W1 rows (+ b1 in BIAS_LANE row)
                      w2b2_ref,    # (1, H+1)   [w2 | b2]
                      out_ref):    # (1, N)     lane-dense scores
    f32 = jnp.float32

    # One MXU matmul: all 4 projections (q@W_p, prev@W_s_*) + passthrough/bias lanes.
    projrow = jnp.dot(qprev_ref[...], wproj_ref[...],
                      preferred_element_type=f32)                    # (1, 128)

    # One VPU multiply + one MXU matmul: interactions, feature concat, mask,
    # hidden layer and its bias all at once (lane-sums done on the MXU, not XLU).
    pre = jnp.dot(feat_ref[...] * projrow, w1_ref[...],
                  preferred_element_type=f32)                        # (N, H)
    h = jnp.maximum(pre, 0.0)                                        # ReLU

    # Output layer, lane-dense: scores(1, N) = w2(1, H) . h(N, H)^T + b2.
    w2 = w2b2_ref[:, 0:HIDDEN]                                       # (1, H)
    b2 = w2b2_ref[:, HIDDEN:HIDDEN + 1]                              # (1, 1)
    scores = lax.dot_general(w2, h, (((1,), (1,)), ((), ())),
                             preferred_element_type=f32) + b2        # (1, N)
    out_ref[...] = scores.astype(out_ref.dtype)


def _pack_operands(overlap, p_in, lit_in, cat_in, ent_in, s_in,
                   q, pf, ps, pa, params, mask):
    """Build the 5 consolidated kernel operands (plain XLA ops, run once)."""
    f32 = jnp.float32
    n = p_in.shape[1]

    # --- (1, 128) packed question / previous-answer row -----------------------
    qprev = jnp.zeros((1, LANES), f32)
    qprev = qprev.at[0, 0:Q_DIM].set(q[0].astype(f32))
    qprev = qprev.at[0, Q_DIM:Q_DIM + E_DIM].set(pf[0].astype(f32))
    qprev = qprev.at[0, Q_DIM + E_DIM:Q_DIM + 2 * E_DIM].set(ps[0].astype(f32))
    qprev = qprev.at[0, Q_DIM + 2 * E_DIM:Q_DIM + 3 * E_DIM].set(pa[0].astype(f32))
    qprev = qprev.at[0, ONES_LANE].set(1.0)

    # --- (N, 128) packed per-entity feature block ------------------------------
    feat = jnp.zeros((n, LANES), f32)
    feat = feat.at[:, 0:N_OV].set(overlap[0].astype(f32))
    blocks = (p_in[0], lit_in[0], cat_in[0], ent_in[0], s_in[0], s_in[0], s_in[0])
    for c, blk in enumerate(blocks):
        off = N_OV + c * E_DIM
        feat = feat.at[:, off:off + E_DIM].set(blk.astype(f32))
    feat = feat.at[:, BIAS_LANE].set(1.0)

    # --- (128, 128) block-structured projection weight -------------------------
    wproj = jnp.zeros((LANES, LANES), f32)
    wp_t = params["W_p"].T.astype(f32)                    # (Q, E) = W_p.weight.T
    for c in range(4):                                    # shared W (same_w=True)
        off = N_OV + c * E_DIM
        wproj = wproj.at[0:Q_DIM, off:off + E_DIM].set(wp_t)
    ws = (params["W_s_first"].T, params["W_s_second"].T, params["W_s_avg"].T)
    for c, w in enumerate(ws):
        r0 = Q_DIM + c * E_DIM
        c0 = N_OV + (4 + c) * E_DIM
        wproj = wproj.at[r0:r0 + E_DIM, c0:c0 + E_DIM].set(w.astype(f32))
    # passthrough row: overlap lanes and the bias lane get multiplier 1.0
    wproj = wproj.at[ONES_LANE, 0:N_OV].set(1.0)
    wproj = wproj.at[ONES_LANE, BIAS_LANE].set(1.0)

    # --- (128, H) expanded masked hidden-layer weight (+ b1 folded in) ---------
    w1m = mask.reshape(N_FEAT, 1).astype(f32) * params["mlp_w1"].T.astype(f32)  # (12, H)
    w1big = jnp.zeros((LANES, HIDDEN), f32)
    w1big = w1big.at[0:N_OV, :].set(w1m[0:N_OV])
    for c in range(N_INT):
        off = N_OV + c * E_DIM
        w1big = w1big.at[off:off + E_DIM, :].set(
            jnp.broadcast_to(w1m[N_OV + c], (E_DIM, HIDDEN)))
    w1big = w1big.at[BIAS_LANE, :].set(params["mlp_b1"].astype(f32))

    # --- (1, H+1) output-layer weights + bias -----------------------------------
    w2b2 = jnp.concatenate([params["mlp_w2"].reshape(1, HIDDEN).astype(f32),
                            params["mlp_b2"].reshape(1, 1).astype(f32)], axis=-1)

    return qprev, feat, wproj, w1big, w2b2


@jax.jit
def _forward_impl(overlap, p_in, lit_in, cat_in, ent_in, s_in,
                  q, pf, ps, pa, params, mask):
    n = p_in.shape[1]
    operands = _pack_operands(overlap, p_in, lit_in, cat_in, ent_in, s_in,
                              q, pf, ps, pa, params, mask)
    vmem = pl.BlockSpec(memory_space=pltpu.MemorySpace.VMEM)
    return pl.pallas_call(
        model_mult_kernel,
        out_shape=jax.ShapeDtypeStruct((1, n), jnp.float32),
        in_specs=[vmem] * len(operands),
        out_specs=vmem,
    )(*operands)


def model_mult_forward(overlap_features, p_inputs, lit_inputs, cat_inputs,
                       ent_inputs, s_inputs, question_embedding,
                       prev_first, prev_second, prev_avg,
                       params, features_mask=None):
    """Mirrors ModelMult.forward (interaction='mult', same_w=True).

    3D inputs are (1, N, .) and 2D inputs are (1, .), like the PyTorch module.
    Returns (1, N) float32 scores.
    """
    if features_mask is None:
        features_mask = jnp.ones((N_FEAT,), jnp.float32)
    return _forward_impl(overlap_features, p_inputs, lit_inputs, cat_inputs,
                         ent_inputs, s_inputs, question_embedding,
                         prev_first, prev_second, prev_avg,
                         params, features_mask)


def _reference_forward(overlap, p_in, lit_in, cat_in, ent_in, s_in,
                       q, pf, ps, pa, params, mask):
    """Pure-JAX reference replicating the PyTorch semantics."""
    def lin(x, w):        # nn.Linear(bias=False): x @ w.T
        return x @ w.T

    def mult_inter(qv, w, s):
        return jnp.sum(lin(qv, w) * s, axis=-1, keepdims=True)

    p_i = mult_inter(q, params["W_p"], p_in)
    l_i = mult_inter(q, params["W_p"], lit_in)
    c_i = mult_inter(q, params["W_p"], cat_in)
    e_i = mult_inter(q, params["W_p"], ent_in)
    sf = mult_inter(pf, params["W_s_first"], s_in)
    ss = mult_inter(ps, params["W_s_second"], s_in)
    sa = mult_inter(pa, params["W_s_avg"], s_in)
    feats = jnp.concatenate([overlap, p_i, l_i, c_i, e_i, sf, ss, sa], axis=-1)
    feats = feats * mask.reshape(1, 1, -1)
    h = jax.nn.relu(feats @ params["mlp_w1"].T + params["mlp_b1"])
    out = h @ params["mlp_w2"].T + params["mlp_b2"]
    return out[..., 0]    # (1, N)


def _init_params(key):
    ks = jax.random.split(key, 8)
    s = 0.05
    return {
        # mult interaction weights (nn.Linear weight shape = (out, in))
        "W_p":        s * jax.random.normal(ks[0], (E_DIM, Q_DIM), jnp.float32),
        "W_s_first":  s * jax.random.normal(ks[1], (E_DIM, E_DIM), jnp.float32),
        "W_s_second": s * jax.random.normal(ks[2], (E_DIM, E_DIM), jnp.float32),
        "W_s_avg":    s * jax.random.normal(ks[3], (E_DIM, E_DIM), jnp.float32),
        # ModelCosine head: masked MLP (see TODO at top)
        "mlp_w1": s * jax.random.normal(ks[4], (HIDDEN, N_FEAT), jnp.float32),
        "mlp_b1": s * jax.random.normal(ks[5], (HIDDEN,), jnp.float32),
        "mlp_w2": s * jax.random.normal(ks[6], (1, HIDDEN), jnp.float32),
        "mlp_b2": s * jax.random.normal(ks[7], (1,), jnp.float32),
    }


if __name__ == "__main__":
    key = jax.random.PRNGKey(0)
    kp, ki = jax.random.split(key)
    params = _init_params(kp)

    kk = jax.random.split(ki, 10)
    overlap = jax.random.normal(kk[0], (1, N, N_OV), jnp.float32)
    p_in = jax.random.normal(kk[1], (1, N, E_DIM), jnp.float32)
    lit_in = jax.random.normal(kk[2], (1, N, E_DIM), jnp.float32)
    cat_in = jax.random.normal(kk[3], (1, N, E_DIM), jnp.float32)
    ent_in = jax.random.normal(kk[4], (1, N, E_DIM), jnp.float32)
    s_in = jax.random.normal(kk[5], (1, N, E_DIM), jnp.float32)
    q_emb = jax.random.normal(kk[6], (1, Q_DIM), jnp.float32)
    prev_first = jax.random.normal(kk[7], (1, E_DIM), jnp.float32)
    prev_second = jax.random.normal(kk[8], (1, E_DIM), jnp.float32)
    prev_avg = jax.random.normal(kk[9], (1, E_DIM), jnp.float32)
    feat_mask = jnp.ones((N_FEAT,), jnp.float32)

    scores = model_mult_forward(overlap, p_in, lit_in, cat_in, ent_in, s_in,
                                q_emb, prev_first, prev_second, prev_avg,
                                params, feat_mask)
    scores = jax.block_until_ready(scores)

    ref = _reference_forward(overlap, p_in, lit_in, cat_in, ent_in, s_in,
                             q_emb, prev_first, prev_second, prev_avg,
                             params, feat_mask)
    assert scores.shape == (1, N), scores.shape
    assert jnp.allclose(scores, ref, atol=1e-4, rtol=1e-4), (scores, ref)
    print("KERNEL_OK")
</pallas_src>

<mosaic_0001>
module attributes {stable_mosaic.version = 11 : i64} {
  func.func @model_mult_kernel(%arg0: memref<1x128xf32, #tpu.memory_space<vmem>>, %arg1: memref<8x128xf32, #tpu.memory_space<vmem>>, %arg2: memref<128x128xf32, #tpu.memory_space<vmem>>, %arg3: memref<128x16xf32, #tpu.memory_space<vmem>>, %arg4: memref<1x17xf32, #tpu.memory_space<vmem>>, %arg5: memref<1x8xf32, #tpu.memory_space<vmem>>) attributes {dimension_semantics = [], scalar_prefetch = 0 : i64, scratch_operands = 0 : i64, tpu.core_type = #tpu.core_type<tc>} {
    %c0 = arith.constant 0 : index
    %c0_0 = arith.constant 0 : index
    %0 = vector.load %arg0[%c0, %c0_0] : memref<1x128xf32, #tpu.memory_space<vmem>>, vector<1x128xf32>
    %c0_1 = arith.constant 0 : index
    %c0_2 = arith.constant 0 : index
    %1 = vector.load %arg2[%c0_1, %c0_2] : memref<128x128xf32, #tpu.memory_space<vmem>>, vector<128x128xf32>
    %cst = arith.constant dense<0.000000e+00> : vector<1x128xf32>
    %2 = tpu.matmul %0, %1, %cst {dimension_numbers = #tpu.dot_dimension_numbers<[1], [0], [0], [1], [0, 0, 1, 1], [], []>} : vector<1x128xf32>, vector<128x128xf32>, vector<1x128xf32> -> vector<1x128xf32>
    %c0_3 = arith.constant 0 : index
    %c0_4 = arith.constant 0 : index
    %3 = vector.load %arg1[%c0_3, %c0_4] : memref<8x128xf32, #tpu.memory_space<vmem>>, vector<8x128xf32>
    %4 = vector.broadcast %2 : vector<1x128xf32> to vector<8x128xf32>
    %5 = arith.mulf %3, %4 : vector<8x128xf32>
    %c0_5 = arith.constant 0 : index
    %c0_6 = arith.constant 0 : index
    %6 = vector.load %arg3[%c0_5, %c0_6] : memref<128x16xf32, #tpu.memory_space<vmem>>, vector<128x16xf32>
    %cst_7 = arith.constant dense<0.000000e+00> : vector<8x16xf32>
    %7 = tpu.matmul %5, %6, %cst_7 {dimension_numbers = #tpu.dot_dimension_numbers<[1], [0], [0], [1], [0, 0, 1, 1], [], []>} : vector<8x128xf32>, vector<128x16xf32>, vector<8x16xf32> -> vector<8x16xf32>
    %cst_8 = arith.constant 0.000000e+00 : f32
    %8 = vector.broadcast %cst_8 : f32 to vector<8x16xf32>
    %9 = arith.maximumf %7, %8 : vector<8x16xf32>
    %c0_9 = arith.constant 0 : index
    %c0_10 = arith.constant 0 : index
    %10 = vector.load %arg4[%c0_9, %c0_10] : memref<1x17xf32, #tpu.memory_space<vmem>>, vector<1x16xf32>
    %c0_11 = arith.constant 0 : index
    %c16 = arith.constant 16 : index
    %11 = vector.load %arg4[%c0_11, %c16] : memref<1x17xf32, #tpu.memory_space<vmem>>, vector<1x1xf32>
    %cst_12 = arith.constant dense<0.000000e+00> : vector<1x8xf32>
    %12 = tpu.matmul %10, %9, %cst_12 {dimension_numbers = #tpu.dot_dimension_numbers<[1], [1], [0], [0], [0, 0, 1, 0], [], []>} : vector<1x16xf32>, vector<8x16xf32>, vector<1x8xf32> -> vector<1x8xf32>
    %13 = vector.broadcast %11 : vector<1x1xf32> to vector<1x8xf32>
    %14 = arith.addf %12, %13 : vector<1x8xf32>
    %c0_13 = arith.constant 0 : index
    %c0_14 = arith.constant 0 : index
    %15 = vector.load %arg5[%c0_13, %c0_14] : memref<1x8xf32, #tpu.memory_space<vmem>>, vector<1x8xf32>
    tpu.vector_store %arg5[%c0_13, %c0_14], %14 {strides = array<i32>} : memref<1x8xf32, #tpu.memory_space<vmem>>, vector<1x8xf32>,
    return
  }
}

</mosaic_0001>

<llo_original>
// kernel: _forward_impl.1
$region0: #{_forward_impl.1}
  #allocation0 [shape = 'u32[]', space=smem, size = 0x4, offset = 0x4, fixed_abs, tag = 'smem constant byte address 0x4 - core index']
  #allocation1 [shape = 'u32[72,128]{1,0:T(1,128)}', space=vmem, size = 0x9000, scoped, tag = 'internal scratch']
  %s0 = inlined_call_operand.vmem [shape: f32[1,128], index: 0, kind: input, shape index: {}]
  %s1 = inlined_call_operand.vmem [shape: f32[8,128], index: 1, kind: input, shape index: {}]
  %s2 = inlined_call_operand.vmem [shape: f32[128,128], index: 2, kind: input, shape index: {}]
  %s3 = inlined_call_operand.vmem [shape: f32[128,16], index: 3, kind: input, shape index: {}]
  %s4 = inlined_call_operand.vmem [shape: f32[1,17], index: 4, kind: input, shape index: {}]
  %s5 = inlined_call_operand.hbm [shape: f32[1,8], index: 5, kind: output, shape index: {}]
  %s6 = sld [smem:[#allocation0]]
  $region30: #{_forward_impl.1} parent=0
    _
  %s8 = ssub.s32 1, %s6
  %s9 = scalar_select 0, %s8, %s6
  $region1: #{_forward_impl.1} parent=0
    #allocation2 [shape = 'u8[512]{0}', space=vmem, size = 0x400, scoped, tag = 'output window, operand 0, single buffered']
    #allocation3 [shape = 's32[1]{0}', space=sflag, size = 0x4, scoped, tag = 'scoped memory for _forward_impl.1']
    %10 = vsyncpa [#allocation3], 0
    // Predicated region
    $region2: #{_forward_impl.1} parent=1 // pred_check
      _
    $region3: #{_forward_impl.1} parent=1 // pred_check_branch
      %12 = sbr.rel (0) target = $region5
    $region4: #{_forward_impl.1} parent=1 // pred_region
      _
    $region5: #{_forward_impl.1} parent=1 // pred_fallthru
      _
    // Predicated region
    $region6: #{_forward_impl.1} parent=1 // pred_check
      _
    $region7: #{_forward_impl.1} parent=1 // pred_check_branch
      %14 = sbr.rel (0) target = $region9
    $region8: #{_forward_impl.1} parent=1 // pred_region
      _
    $region9: #{_forward_impl.1} parent=1 // pred_fallthru
      _
    // Predicated region
    $region10: #{_forward_impl.1} parent=1 // pred_check
      _
    $region11: #{_forward_impl.1} parent=1 // pred_check_branch
      %16 = sbr.rel (0) target = $region13
    $region12: #{_forward_impl.1} parent=1 // pred_region
      _
    $region13: #{_forward_impl.1} parent=1 // pred_fallthru
      _
    // Predicated region
    $region14: #{_forward_impl.1} parent=1 // pred_check
      _
    $region15: #{_forward_impl.1} parent=1 // pred_check_branch
      %18 = sbr.rel (0) target = $region17
    $region16: #{_forward_impl.1} parent=1 // pred_region
      _
    $region17: #{_forward_impl.1} parent=1 // pred_fallthru
      _
    // Predicated region
    $region18: #{_forward_impl.1} parent=1 // pred_check
      _
    $region19: #{_forward_impl.1} parent=1 // pred_check_branch
      %20 = sbr.rel (0) target = $region21
    $region20: #{_forward_impl.1} parent=1 // pred_region
      _
    $region21: #{_forward_impl.1} parent=1 // pred_fallthru
      _
    %v21 = vld [vmem:[%s0] sm:$0x1]
    %v22 = vld [vmem:[%s2] sm:$0xff]
    %v23 = vld [vmem:[%s2 + $0x8] sm:$0xff]
    %v24 = vld [vmem:[%s2 + $0x10] sm:$0xff]
    %v25 = vld [vmem:[%s2 + $0x18] sm:$0xff]
    %v26 = vld [vmem:[%s2 + $0x20] sm:$0xff]
    %v27 = vld [vmem:[%s2 + $0x28] sm:$0xff]
    %v28 = vld [vmem:[%s2 + $0x30] sm:$0xff]
    %v29 = vld [vmem:[%s2 + $0x38] sm:$0xff]
    %v30 = vld [vmem:[%s2 + $0x40] sm:$0xff]
    %v31 = vld [vmem:[%s2 + $0x48] sm:$0xff]
    %v32 = vld [vmem:[%s2 + $0x50] sm:$0xff]
    %v33 = vld [vmem:[%s2 + $0x58] sm:$0xff]
    %v34 = vld [vmem:[%s2 + $0x60] sm:$0xff]
    %v35 = vld [vmem:[%s2 + $0x68] sm:$0xff]
    %v36 = vld [vmem:[%s2 + $0x70] sm:$0xff]
    %v37 = vld [vmem:[%s2 + $0x78] sm:$0xff]
    %38 = vmatpush.msra.mxu0 %v37
    %39 = vmatpush.msra.mxu0 %v36
    %40 = vmatpush.msra.mxu0 %v35
    %41 = vmatpush.msra.mxu0 %v34
    %42 = vmatpush.msra.mxu0 %v33
    %43 = vmatpush.msra.mxu0 %v32
    %44 = vmatpush.msra.mxu0 %v31
    %45 = vmatpush.msra.mxu0 %v30
    %46 = vmatpush.msra.mxu0 %v29
    %47 = vmatpush.msra.mxu0 %v28
    %48 = vmatpush.msra.mxu0 %v27
    %49 = vmatpush.msra.mxu0 %v26
    %50 = vmatpush.msra.mxu0 %v25
    %51 = vmatpush.msra.mxu0 %v24
    %52 = vmatpush.msra.mxu0 %v23
    %53 = vmatpush.msra.mxu0 %v22
    %54 = vmatmul.f32.gmra.mxu0 %v21
    %v55 = vpop.f32.mrf.mxu0
    %v56 = vadd.f32 0.0, %v55
    %57 = vdwg.mxu0
    %v58 = vld [vmem:[%s1] sm:$0xff]
    %v59 = vperm.slane %v56, 0
    %v60 = vmul.f32 %v58, %v59
    %v61 = vld [vmem:[%s3] sm:$0xff]
    %v62 = vld [vmem:[%s3 + $0x8] sm:$0xff]
    %v63 = vld [vmem:[%s3 + $0x10] sm:$0xff]
    %v64 = vld [vmem:[%s3 + $0x18] sm:$0xff]
    %v65 = vld [vmem:[%s3 + $0x20] sm:$0xff]
    %v66 = vld [vmem:[%s3 + $0x28] sm:$0xff]
    %v67 = vld [vmem:[%s3 + $0x30] sm:$0xff]
    %v68 = vld [vmem:[%s3 + $0x38] sm:$0xff]
    %v69 = vld [vmem:[%s3 + $0x40] sm:$0xff]
    %v70 = vld [vmem:[%s3 + $0x48] sm:$0xff]
    %v71 = vld [vmem:[%s3 + $0x50] sm:$0xff]
    %v72 = vld [vmem:[%s3 + $0x58] sm:$0xff]
    %v73 = vld [vmem:[%s3 + $0x60] sm:$0xff]
    %v74 = vld [vmem:[%s3 + $0x68] sm:$0xff]
    %v75 = vld [vmem:[%s3 + $0x70] sm:$0xff]
    %v76 = vld [vmem:[%s3 + $0x78] sm:$0xff]
    %77 = vmatpush.msra.mxu0 %v76
    %78 = vmatpush.msra.mxu0 %v75
    %79 = vmatpush.msra.mxu0 %v74
    %80 = vmatpush.msra.mxu0 %v73
    %81 = vmatpush.msra.mxu0 %v72
    %82 = vmatpush.msra.mxu0 %v71
    %83 = vmatpush.msra.mxu0 %v70
    %84 = vmatpush.msra.mxu0 %v69
    %85 = vmatpush.msra.mxu0 %v68
    %86 = vmatpush.msra.mxu0 %v67
    %87 = vmatpush.msra.mxu0 %v66
    %88 = vmatpush.msra.mxu0 %v65
    %89 = vmatpush.msra.mxu0 %v64
    %90 = vmatpush.msra.mxu0 %v63
    %91 = vmatpush.msra.mxu0 %v62
    %92 = vmatpush.msra.mxu0 %v61
    %93 = vmatmul.f32.gmra.mxu0 %v60
    %v94 = vpop.f32.mrf.mxu0
    %v95 = vadd.f32 0.0, %v94
    %96 = vdwg.mxu0
    %v97 = vmax.f32 %v95, 0.0
    %v98 = vld [vmem:[%s4] sm:$0x1]
    %100 = vset.pattern.permute.xlu0 16
    %101 = vperm.xlu0 %100, %v98
    %v102 = vpop.permute.xlu0 %101
    %v104 = vperm.slane %v102, 0
    %vm105 = vcmask 130048
    %v106 = vsel %vm105, %v98, 0
    %v109 = vsel %vm105, %v97, 0
    %111 = vmatpush.xpose.msra.mxu0 0.0
    %112 = vmatpush.xpose.msra.mxu0 0.0
    %113 = vmatpush.xpose.msra.mxu0 0.0
    %114 = vmatpush.xpose.msra.mxu0 0.0
    %115 = vmatpush.xpose.msra.mxu0 0.0
    %116 = vmatpush.xpose.msra.mxu0 0.0
    %117 = vmatpush.xpose.msra.mxu0 0.0
    %118 = vmatpush.xpose.msra.mxu0 0.0
    %119 = vmatpush.xpose.msra.mxu0 0.0
    %120 = vmatpush.xpose.msra.mxu0 0.0
    %121 = vmatpush.xpose.msra.mxu0 0.0
    %122 = vmatpush.xpose.msra.mxu0 0.0
    %123 = vmatpush.xpose.msra.mxu0 0.0
    %124 = vmatpush.xpose.msra.mxu0 0.0
    %125 = vmatpush.xpose.msra.mxu0 0.0
    %126 = vmatpush.xpose.msra.mxu0 %v109
    %127 = vmatmul.f32.gmra.mxu0 %v106
    %v128 = vpop.f32.mrf.mxu0
    %v129 = vadd.f32 %v104, %v128
    %130 = vdwg.mxu0
    %vm131 = vcmask 57344
    %132 = vst.msk [vmem:[#allocation2] sm:$0x1] %vm131, %v129
    // Predicated region
    $region22: #{_forward_impl.1} parent=1 // pred_check
      _
    $region23: #{_forward_impl.1} parent=1 // pred_check_branch
      %134 = sbr.rel (0) target = $region25
    $region24: #{_forward_impl.1} parent=1 // pred_region
      %136 = vsyncadd [#allocation3], 0
      %s138 = sshll.u32 [#allocation2], 4
      %s139 = int_to_ptr.vmem [resolvable:$true] %s138
      %s140 = sshll.u32 %s5, 4
      %s141 = int_to_ptr.hbm [resolvable:$true] %s140
      %143 = dma.vmem_to_hbm [thread:$0]  %s139, 16, %s141, [#allocation3]
    $region25: #{_forward_impl.1} parent=1 // pred_fallthru
      _
    // Predicated region
    $region26: #{_forward_impl.1} parent=1 // pred_check
      _
    $region27: #{_forward_impl.1} parent=1 // pred_check_branch
      %145 = sbr.rel (0) target = $region29
    $region28: #{_forward_impl.1} parent=1 // pred_region
      %147 = dma.done [#allocation3], 16
    $region29: #{_forward_impl.1} parent=1 // pred_fallthru
      _
    %148 = vsyncpa [#allocation3], 1

</llo_original>
